<compile_context>
chip_gen: v7x
topology: tpu7x:2x2x1
jax: 0.10.0
libtpu: 0.0.40
codegen_flags: <defaults>
</compile_context>

<pallas_src>
import jax
import jax.numpy as jnp
import numpy as np
from jax.experimental import pallas as pl
from jax.experimental.pallas import tpu as pltpu


def _stgcn_kernel(w_ref, x_ref, b_ref, adjbd_ref, o_ref):
    # w_ref     : (C_out, C_in)    1x1 conv weight (kernel dim squeezed)
    # x_ref     : (C_in, N*V)      input, channels x (batch*node), lane-dense
    # b_ref     : (C_out, N*V)     conv bias pre-broadcast in the wrapper
    # adjbd_ref : (N*V, N*V)       block-diagonal kron(I_N, adj.T)
    # o_ref     : (C_out, N*V)
    x = x_ref[...]
    # 1x1 Conv1d == channel matmul + bias, all batches/nodes at once (MXU).
    support = jnp.dot(w_ref[...], x, preferred_element_type=jnp.float32) + b_ref[...]
    # Graph aggregation for every batch element in one lane-dense matmul (MXU).
    out = jnp.dot(support, adjbd_ref[...], preferred_element_type=jnp.float32)
    # Identity residual (in_features == out_features) + ReLU (VPU).
    o_ref[...] = jnp.maximum(out + x, 0.0).astype(o_ref.dtype)


def stgcn_graph_convolution(x, weight, bias, adj):
    """x: (N, C_in, V) f32; weight: (C_out, C_in); bias: (C_out,); adj: (V, V)."""
    N, C_in, V = x.shape
    C_out = weight.shape[0]
    if C_in != C_out:
        # TODO(synk): Conv1d + BatchNorm1d residual branch (in != out features)
        # of the PyTorch module is not implemented here.
        raise NotImplementedError("identity residual requires in_features == out_features")
    NV = N * V

    # Wrapper-side layout plumbing (one-time XLA ops, not in the kernel):
    #   x    (N, C, V) -> (C, N*V): lane-dense operand for both the conv matmul
    #                               and the identity residual.
    #   adj  (V, V)    -> kron(I_N, adj.T): per-batch node aggregation becomes a
    #                               single lane-dense matmul, aligned so the
    #                               result is bit-identical to per-batch matmul.
    #   bias (C_out,)  -> (C_out, N*V): pre-broadcast, so the kernel has no
    #                               broadcast_in_dim at all.
    x2d = jnp.transpose(x, (1, 0, 2)).reshape(C_in, NV)
    adj_bd = jnp.kron(jnp.eye(N, dtype=adj.dtype), adj.T)          # (NV, NV)
    bias2d = jnp.broadcast_to(bias[:, None], (C_out, NV))          # (C_out, NV)

    # Grid-free call: the whole problem lives in VMEM; no per-step overhead,
    # no cross-core split of this ~1 us workload on v7x.
    # TODO(synk): for large V (general graphs), tile adj along an "arbitrary"
    # node-reduction grid axis and accumulate in VMEM scratch to stay within
    # v7x's 64 MiB VMEM; unnecessary for skeleton-sized V.
    vmem = pl.BlockSpec(memory_space=pltpu.MemorySpace.VMEM)
    out2d = pl.pallas_call(
        _stgcn_kernel,
        out_shape=jax.ShapeDtypeStruct((C_out, NV), x.dtype),
        in_specs=[vmem, vmem, vmem, vmem],
        out_specs=vmem,
    )(weight, x2d, bias2d, adj_bd)

    # Back to the PyTorch NCW layout (N, C_out, V).
    return jnp.transpose(out2d.reshape(C_out, N, V), (1, 0, 2))


def _reference(x, weight, bias, adj):
    # Pure-JAX reference mirroring the PyTorch forward (eval, dropout=0,
    # dense adj, identity residual).
    support = jnp.einsum("oc,ncv->nov", weight, x) + bias[None, :, None]
    output = jnp.matmul(support, adj.T)
    return jax.nn.relu(output + x)


if __name__ == "__main__":
    # Small shapes consistent with the module: batch=8, channels in==out=8,
    # nodes=16 (skeleton-sized graph).  N*V = 128 -> fully lane-dense blocks.
    N, C, V = 8, 8, 16

    key = jax.random.PRNGKey(0)
    k_x, k_w, k_b, k_a = jax.random.split(key, 4)

    x = jax.random.normal(k_x, (N, C, V), dtype=jnp.float32)
    # Conv1d(in=C, out=C, kernel=1) parameters (kernel dim of size 1 squeezed).
    weight = jax.random.normal(k_w, (C, C), dtype=jnp.float32) * 0.2
    bias = jax.random.normal(k_b, (C,), dtype=jnp.float32) * 0.1
    # Adjacency buffer (dense path; sparse=False), row-normalized, deterministic.
    adj = jax.random.uniform(k_a, (V, V), dtype=jnp.float32)
    adj = adj / jnp.sum(adj, axis=1, keepdims=True)

    out = stgcn_graph_convolution(x, weight, bias, adj)
    out = jax.block_until_ready(out)

    ref = _reference(x, weight, bias, adj)
    np.testing.assert_allclose(np.asarray(out), np.asarray(ref), rtol=1e-5, atol=1e-5)

    # TODO(synk): the `sparse=True` branch (torch.sparse.mm loop) and dropout>0
    # training-mode behaviour are not exercised by this configuration.
    print("KERNEL_OK")
</pallas_src>

<mosaic_0001>
module attributes {stable_mosaic.version = 11 : i64} {
  func.func @_stgcn_kernel(%arg0: memref<8x8xf32, #tpu.memory_space<vmem>>, %arg1: memref<8x128xf32, #tpu.memory_space<vmem>>, %arg2: memref<8x128xf32, #tpu.memory_space<vmem>>, %arg3: memref<128x128xf32, #tpu.memory_space<vmem>>, %arg4: memref<8x128xf32, #tpu.memory_space<vmem>>) attributes {dimension_semantics = [], scalar_prefetch = 0 : i64, scratch_operands = 0 : i64, tpu.core_type = #tpu.core_type<tc>} {
    %c0 = arith.constant 0 : index
    %c0_0 = arith.constant 0 : index
    %0 = vector.load %arg1[%c0, %c0_0] : memref<8x128xf32, #tpu.memory_space<vmem>>, vector<8x128xf32>
    %c0_1 = arith.constant 0 : index
    %c0_2 = arith.constant 0 : index
    %1 = vector.load %arg0[%c0_1, %c0_2] : memref<8x8xf32, #tpu.memory_space<vmem>>, vector<8x8xf32>
    %cst = arith.constant dense<0.000000e+00> : vector<8x128xf32>
    %2 = tpu.matmul %1, %0, %cst {dimension_numbers = #tpu.dot_dimension_numbers<[1], [0], [0], [1], [0, 0, 1, 1], [], []>} : vector<8x8xf32>, vector<8x128xf32>, vector<8x128xf32> -> vector<8x128xf32>
    %c0_3 = arith.constant 0 : index
    %c0_4 = arith.constant 0 : index
    %3 = vector.load %arg2[%c0_3, %c0_4] : memref<8x128xf32, #tpu.memory_space<vmem>>, vector<8x128xf32>
    %4 = arith.addf %2, %3 : vector<8x128xf32>
    %c0_5 = arith.constant 0 : index
    %c0_6 = arith.constant 0 : index
    %5 = vector.load %arg3[%c0_5, %c0_6] : memref<128x128xf32, #tpu.memory_space<vmem>>, vector<128x128xf32>
    %cst_7 = arith.constant dense<0.000000e+00> : vector<8x128xf32>
    %6 = tpu.matmul %4, %5, %cst_7 {dimension_numbers = #tpu.dot_dimension_numbers<[1], [0], [0], [1], [0, 0, 1, 1], [], []>} : vector<8x128xf32>, vector<128x128xf32>, vector<8x128xf32> -> vector<8x128xf32>
    %7 = arith.addf %6, %0 : vector<8x128xf32>
    %cst_8 = arith.constant 0.000000e+00 : f32
    %8 = vector.broadcast %cst_8 : f32 to vector<8x128xf32>
    %9 = arith.maximumf %7, %8 : vector<8x128xf32>
    %c0_9 = arith.constant 0 : index
    %c0_10 = arith.constant 0 : index
    %10 = vector.load %arg4[%c0_9, %c0_10] : memref<8x128xf32, #tpu.memory_space<vmem>>, vector<8x128xf32>
    tpu.vector_store %arg4[%c0_9, %c0_10], %9 {strides = array<i32>} : memref<8x128xf32, #tpu.memory_space<vmem>>, vector<8x128xf32>,
    return
  }
}

</mosaic_0001>

<llo_original>
// kernel: tpu_custom_call.1
$region0: #{tpu_custom_call.1}
  #allocation0 [shape = 'u32[]', space=smem, size = 0x4, offset = 0x4, fixed_abs, tag = 'smem constant byte address 0x4 - core index']
  #allocation1 [shape = 'u32[144,128]{1,0:T(1,128)}', space=vmem, size = 0x12000, scoped, tag = 'internal scratch']
  %s0 = inlined_call_operand.hbm [shape: f32[8,8], index: 0, kind: input, shape index: {}]
  %s1 = inlined_call_operand.hbm [shape: f32[8,128], index: 1, kind: input, shape index: {}]
  %s2 = inlined_call_operand.hbm [shape: f32[8,128], index: 2, kind: input, shape index: {}]
  %s3 = inlined_call_operand.hbm [shape: f32[128,128], index: 3, kind: input, shape index: {}]
  %s4 = inlined_call_operand.hbm [shape: f32[8,128], index: 4, kind: output, shape index: {}]
  %s5 = sld [smem:[#allocation0]]
  $region42: #{tpu_custom_call.1} parent=0
    _
  %s7 = ssub.s32 1, %s5
  %s8 = scalar_select 0, %s7, %s5
  $region1: #{tpu_custom_call.1} parent=0
    #allocation2 [shape = 'u8[4096]{0}', space=vmem, size = 0x1000, scoped, tag = 'input window, operand 0, single buffered']
    #allocation3 [shape = 's32[1]{0}', space=sflag, size = 0x4, scoped, tag = 'scoped memory for tpu_custom_call.1']
    #allocation4 [shape = 's32[1]{0}', space=sflag, size = 0x4, scoped, tag = 'scoped memory for tpu_custom_call.1']
    #allocation5 [shape = 'u8[4096]{0}', space=vmem, size = 0x1000, scoped, tag = 'input window, operand 1, single buffered']
    #allocation6 [shape = 's32[1]{0}', space=sflag, size = 0x4, scoped, tag = 'scoped memory for tpu_custom_call.1']
    #allocation7 [shape = 'u8[4096]{0}', space=vmem, size = 0x1000, scoped, tag = 'input window, operand 2, single buffered']
    #allocation8 [shape = 'u8[65536]{0}', space=vmem, size = 0x10000, scoped, tag = 'input window, operand 3, single buffered']
    #allocation9 [shape = 's32[1]{0}', space=sflag, size = 0x4, scoped, tag = 'scoped memory for tpu_custom_call.1']
    #allocation10 [shape = 'u8[4096]{0}', space=vmem, size = 0x1000, scoped, tag = 'output window, operand 0, single buffered']
    %9 = vsyncpa [#allocation3], 0
    %10 = vsyncpa [#allocation6], 0
    %11 = vsyncpa [#allocation9], 0
    %12 = vsyncpa [#allocation4], 0
    // Predicated region
    $region2: #{tpu_custom_call.1} parent=1 // pred_check
      _
    $region3: #{tpu_custom_call.1} parent=1 // pred_check_branch
      %14 = sbr.rel (0) target = $region5
    $region4: #{tpu_custom_call.1} parent=1 // pred_region
      %s16 = ssub.s32 128, 128
      %17 = vsyncadd [#allocation3], %s16
      %s19 = sshll.u32 [#allocation2], 4
      %s20 = int_to_ptr.vmem [resolvable:$true] %s19
      %22 = dma.hbm_to_vmem [thread:$0]  %s0, 128, %s20, [#allocation3]
    $region5: #{tpu_custom_call.1} parent=1 // pred_fallthru
      _
    // Predicated region
    $region6: #{tpu_custom_call.1} parent=1 // pred_check
      _
    $region7: #{tpu_custom_call.1} parent=1 // pred_check_branch
      %24 = sbr.rel (0) target = $region9
    $region8: #{tpu_custom_call.1} parent=1 // pred_region
      %s26 = ssub.s32 128, 128
      %27 = vsyncadd [#allocation6], %s26
      %s29 = sshll.u32 [#allocation5], 4
      %s30 = int_to_ptr.vmem [resolvable:$true] %s29
      %32 = dma.hbm_to_vmem [thread:$0]  %s1, 128, %s30, [#allocation6]
    $region9: #{tpu_custom_call.1} parent=1 // pred_fallthru
      _
    // Predicated region
    $region10: #{tpu_custom_call.1} parent=1 // pred_check
      _
    $region11: #{tpu_custom_call.1} parent=1 // pred_check_branch
      %34 = sbr.rel (0) target = $region13
    $region12: #{tpu_custom_call.1} parent=1 // pred_region
      %s36 = ssub.s32 128, 128
      %37 = vsyncadd [#allocation6], %s36
      %s39 = sshll.u32 [#allocation7], 4
      %s40 = int_to_ptr.vmem [resolvable:$true] %s39
      %42 = dma.hbm_to_vmem [thread:$0]  %s2, 128, %s40, [#allocation6]
    $region13: #{tpu_custom_call.1} parent=1 // pred_fallthru
      _
    // Predicated region
    $region14: #{tpu_custom_call.1} parent=1 // pred_check
      _
    $region15: #{tpu_custom_call.1} parent=1 // pred_check_branch
      %44 = sbr.rel (0) target = $region17
    $region16: #{tpu_custom_call.1} parent=1 // pred_region
      %s46 = ssub.s32 2048, 2048
      %47 = vsyncadd [#allocation9], %s46
      %s48 = sshll.u32 [#allocation8], 4
      %s49 = int_to_ptr.vmem [resolvable:$true] %s48
      %54 = dma.hbm_to_vmem [thread:$0]  %s3, 2048, %s49, [#allocation9], 128, 128, 8
    $region17: #{tpu_custom_call.1} parent=1 // pred_fallthru
      _
    // Predicated region
    $region18: #{tpu_custom_call.1} parent=1 // pred_check
      _
    $region19: #{tpu_custom_call.1} parent=1 // pred_check_branch
      %56 = sbr.rel (0) target = $region21
    $region20: #{tpu_custom_call.1} parent=1 // pred_region
      %57 = dma.done [#allocation3], 128
    $region21: #{tpu_custom_call.1} parent=1 // pred_fallthru
      _
    // Predicated region
    $region22: #{tpu_custom_call.1} parent=1 // pred_check
      _
    $region23: #{tpu_custom_call.1} parent=1 // pred_check_branch
      %59 = sbr.rel (0) target = $region25
    $region24: #{tpu_custom_call.1} parent=1 // pred_region
      %60 = dma.done [#allocation6], 128
    $region25: #{tpu_custom_call.1} parent=1 // pred_fallthru
      _
    // Predicated region
    $region26: #{tpu_custom_call.1} parent=1 // pred_check
      _
    $region27: #{tpu_custom_call.1} parent=1 // pred_check_branch
      %62 = sbr.rel (0) target = $region29
    $region28: #{tpu_custom_call.1} parent=1 // pred_region
      %63 = dma.done [#allocation6], 128
    $region29: #{tpu_custom_call.1} parent=1 // pred_fallthru
      _
    // Predicated region
    $region30: #{tpu_custom_call.1} parent=1 // pred_check
      _
    $region31: #{tpu_custom_call.1} parent=1 // pred_check_branch
      %65 = sbr.rel (0) target = $region33
    $region32: #{tpu_custom_call.1} parent=1 // pred_region
      %66 = dma.done [#allocation9], 2048
    $region33: #{tpu_custom_call.1} parent=1 // pred_fallthru
      _
    %v67 = vld [vmem:[#allocation5] sm:$0xff]
    %v68 = vld [vmem:[#allocation2] sm:$0xff]
    %v69 = vld [vmem:[#allocation7] sm:$0xff]
    %vm70 = vcmask 64512
    %v72 = vsel %vm70, %v68, 0
    %74 = vmatprep.subr.mxu0 0.0
    %75 = vmatpush1.msra.mxu0 %v67
    %76 = vmatprep.subr.mxu0 0.0
    %77 = vmatpush1.msra.mxu0 0.0
    %78 = vmatprep.subr.mxu0 0.0
    %79 = vmatpush1.msra.mxu0 0.0
    %80 = vmatprep.subr.mxu0 0.0
    %81 = vmatpush1.msra.mxu0 0.0
    %82 = vmatprep.subr.mxu0 0.0
    %83 = vmatpush1.msra.mxu0 0.0
    %84 = vmatprep.subr.mxu0 0.0
    %85 = vmatpush1.msra.mxu0 0.0
    %86 = vmatprep.subr.mxu0 0.0
    %87 = vmatpush1.msra.mxu0 0.0
    %88 = vmatprep.subr.mxu0 0.0
    %89 = vmatpush1.msra.mxu0 0.0
    %90 = vmatprep.subr.mxu0 0.0
    %91 = vmatpush1.msra.mxu0 0.0
    %92 = vmatprep.subr.mxu0 0.0
    %93 = vmatpush1.msra.mxu0 0.0
    %94 = vmatprep.subr.mxu0 0.0
    %95 = vmatpush1.msra.mxu0 0.0
    %96 = vmatprep.subr.mxu0 0.0
    %97 = vmatpush1.msra.mxu0 0.0
    %98 = vmatprep.subr.mxu0 0.0
    %99 = vmatpush1.msra.mxu0 0.0
    %100 = vmatprep.subr.mxu0 0.0
    %101 = vmatpush1.msra.mxu0 0.0
    %102 = vmatprep.subr.mxu0 0.0
    %103 = vmatpush1.msra.mxu0 0.0
    %104 = vmatprep.subr.mxu0 0.0
    %105 = vmatpush1.msra.mxu0 0.0
    %106 = vmatprep.subr.mxu0 0.0
    %107 = vmatpush1.msra.mxu0 0.0
    %108 = vmatprep.subr.mxu0 0.0
    %109 = vmatpush1.msra.mxu0 0.0
    %110 = vmatprep.subr.mxu0 0.0
    %111 = vmatpush1.msra.mxu0 0.0
    %112 = vmatprep.subr.mxu0 0.0
    %113 = vmatpush1.msra.mxu0 0.0
    %114 = vmatprep.subr.mxu0 0.0
    %115 = vmatpush1.msra.mxu0 0.0
    %116 = vmatprep.subr.mxu0 0.0
    %117 = vmatpush1.msra.mxu0 0.0
    %118 = vmatprep.subr.mxu0 0.0
    %119 = vmatpush1.msra.mxu0 0.0
    %120 = vmatprep.subr.mxu0 0.0
    %121 = vmatpush1.msra.mxu0 0.0
    %122 = vmatprep.subr.mxu0 0.0
    %123 = vmatpush1.msra.mxu0 0.0
    %124 = vmatprep.subr.mxu0 0.0
    %125 = vmatpush1.msra.mxu0 0.0
    %126 = vmatprep.subr.mxu0 0.0
    %127 = vmatpush1.msra.mxu0 0.0
    %128 = vmatprep.subr.mxu0 0.0
    %129 = vmatpush1.msra.mxu0 0.0
    %130 = vmatprep.subr.mxu0 0.0
    %131 = vmatpush1.msra.mxu0 0.0
    %132 = vmatprep.subr.mxu0 0.0
    %133 = vmatpush1.msra.mxu0 0.0
    %134 = vmatprep.subr.mxu0 0.0
    %135 = vmatpush1.msra.mxu0 0.0
    %136 = vmatprep.subr.mxu0 0.0
    %137 = vmatpush1.msra.mxu0 0.0
    %138 = vmatprep.mubr.f32.mxu0 0.0
    %139 = vmatmul.mubr.f32.gmra.mrb[0].mxu0 %v72
    %v140 = vpop.f32.mrb[0].mxu0
    %v141 = vadd.f32 %v69, %v140
    %v142 = vpop.f32.mrb[0].mxu0
    %143 = vdwg.mxu0
    %v144 = vld [vmem:[#allocation8] sm:$0xff]
    %v145 = vld [vmem:[#allocation8 + $0x8] sm:$0xff]
    %v146 = vld [vmem:[#allocation8 + $0x10] sm:$0xff]
    %v147 = vld [vmem:[#allocation8 + $0x18] sm:$0xff]
    %v148 = vld [vmem:[#allocation8 + $0x20] sm:$0xff]
    %v149 = vld [vmem:[#allocation8 + $0x28] sm:$0xff]
    %v150 = vld [vmem:[#allocation8 + $0x30] sm:$0xff]
    %v151 = vld [vmem:[#allocation8 + $0x38] sm:$0xff]
    %v152 = vld [vmem:[#allocation8 + $0x40] sm:$0xff]
    %v153 = vld [vmem:[#allocation8 + $0x48] sm:$0xff]
    %v154 = vld [vmem:[#allocation8 + $0x50] sm:$0xff]
    %v155 = vld [vmem:[#allocation8 + $0x58] sm:$0xff]
    %v156 = vld [vmem:[#allocation8 + $0x60] sm:$0xff]
    %v157 = vld [vmem:[#allocation8 + $0x68] sm:$0xff]
    %v158 = vld [vmem:[#allocation8 + $0x70] sm:$0xff]
    %v159 = vld [vmem:[#allocation8 + $0x78] sm:$0xff]
    %160 = vmatprep.subr.mxu0 0.0
    %161 = vmatpush1.msra.mxu0 %v144
    %162 = vmatprep.subr.mxu0 0.0
    %163 = vmatpush1.msra.mxu0 %v145
    %164 = vmatprep.subr.mxu0 0.0
    %165 = vmatpush1.msra.mxu0 %v146
    %166 = vmatprep.subr.mxu0 0.0
    %167 = vmatpush1.msra.mxu0 %v147
    %168 = vmatprep.subr.mxu0 0.0
    %169 = vmatpush1.msra.mxu0 %v148
    %170 = vmatprep.subr.mxu0 0.0
    %171 = vmatpush1.msra.mxu0 %v149
    %172 = vmatprep.subr.mxu0 0.0
    %173 = vmatpush1.msra.mxu0 %v150
    %174 = vmatprep.subr.mxu0 0.0
    %175 = vmatpush1.msra.mxu0 %v151
    %176 = vmatprep.subr.mxu0 0.0
    %177 = vmatpush1.msra.mxu0 %v152
    %178 = vmatprep.subr.mxu0 0.0
    %179 = vmatpush1.msra.mxu0 %v153
    %180 = vmatprep.subr.mxu0 0.0
    %181 = vmatpush1.msra.mxu0 %v154
    %182 = vmatprep.subr.mxu0 0.0
    %183 = vmatpush1.msra.mxu0 %v155
    %184 = vmatprep.subr.mxu0 0.0
    %185 = vmatpush1.msra.mxu0 %v156
    %186 = vmatprep.subr.mxu0 0.0
    %187 = vmatpush1.msra.mxu0 %v157
    %188 = vmatprep.subr.mxu0 0.0
    %189 = vmatpush1.msra.mxu0 %v158
    %190 = vmatprep.subr.mxu0 0.0
    %191 = vmatpush1.msra.mxu0 %v159
    %192 = vmatprep.subr.mxu0 0.0
    %193 = vmatpush1.msra.mxu0 0.0
    %194 = vmatprep.subr.mxu0 0.0
    %195 = vmatpush1.msra.mxu0 0.0
    %196 = vmatprep.subr.mxu0 0.0
    %197 = vmatpush1.msra.mxu0 0.0
    %198 = vmatprep.subr.mxu0 0.0
    %199 = vmatpush1.msra.mxu0 0.0
    %200 = vmatprep.subr.mxu0 0.0
    %201 = vmatpush1.msra.mxu0 0.0
    %202 = vmatprep.subr.mxu0 0.0
    %203 = vmatpush1.msra.mxu0 0.0
    %204 = vmatprep.subr.mxu0 0.0
    %205 = vmatpush1.msra.mxu0 0.0
    %206 = vmatprep.subr.mxu0 0.0
    %207 = vmatpush1.msra.mxu0 0.0
    %208 = vmatprep.subr.mxu0 0.0
    %209 = vmatpush1.msra.mxu0 0.0
    %210 = vmatprep.subr.mxu0 0.0
    %211 = vmatpush1.msra.mxu0 0.0
    %212 = vmatprep.subr.mxu0 0.0
    %213 = vmatpush1.msra.mxu0 0.0
    %214 = vmatprep.subr.mxu0 0.0
    %215 = vmatpush1.msra.mxu0 0.0
    %216 = vmatprep.subr.mxu0 0.0
    %217 = vmatpush1.msra.mxu0 0.0
    %218 = vmatprep.subr.mxu0 0.0
    %219 = vmatpush1.msra.mxu0 0.0
    %220 = vmatprep.subr.mxu0 0.0
    %221 = vmatpush1.msra.mxu0 0.0
    %222 = vmatprep.subr.mxu0 0.0
    %223 = vmatpush1.msra.mxu0 0.0
    %224 = vmatprep.mubr.f32.mxu0 0.0
    %225 = vmatmul.mubr.f32.gmra.mrb[0].mxu0 %v141
    %v226 = vpop.f32.mrb[0].mxu0
    %v227 = vadd.f32 %v67, %v226
    %v228 = vpop.f32.mrb[0].mxu0
    %229 = vdwg.mxu0
    %v230 = vmax.f32 %v227, 0.0
    %231 = vst [vmem:[#allocation10] sm:$0xff] %v230
    // Predicated region
    $region34: #{tpu_custom_call.1} parent=1 // pred_check
      _
    $region35: #{tpu_custom_call.1} parent=1 // pred_check_branch
      %233 = sbr.rel (0) target = $region37
    $region36: #{tpu_custom_call.1} parent=1 // pred_region
      %s235 = ssub.s32 128, 128
      %236 = vsyncadd [#allocation4], %s235
      %s238 = sshll.u32 [#allocation10], 4
      %s239 = int_to_ptr.vmem [resolvable:$true] %s238
      %241 = dma.vmem_to_hbm [thread:$0]  %s239, 128, %s4, [#allocation4]
    $region37: #{tpu_custom_call.1} parent=1 // pred_fallthru
      _
    // Predicated region
    $region38: #{tpu_custom_call.1} parent=1 // pred_check
      _
    $region39: #{tpu_custom_call.1} parent=1 // pred_check_branch
      %243 = sbr.rel (0) target = $region41
    $region40: #{tpu_custom_call.1} parent=1 // pred_region
      %244 = dma.done [#allocation4], 128
    $region41: #{tpu_custom_call.1} parent=1 // pred_fallthru
      _
    %245 = vsyncpa [#allocation3], 1
    %246 = vsyncpa [#allocation6], 1
    %247 = vsyncpa [#allocation9], 1
    %248 = vsyncpa [#allocation4], 1

</llo_original>
